<compile_context>
chip_gen: v5e
topology: v5e:2x2
jax: 0.10.0
libtpu: 0.0.40
codegen_flags: <defaults>
</compile_context>

<pallas_src>
import functools
import math

import jax
import jax.numpy as jnp
from jax.experimental import pallas as pl
from jax.experimental.pallas import tpu as pltpu


# ------------------------------- helpers --------------------------------------
def _round_up(v, m):
    return ((v + m - 1) // m) * m


def _pad_amounts(kernel_size, causal):
    if kernel_size == 1:
        return 0, 0
    if causal:
        return kernel_size - 1, 0
    return (kernel_size - 1) // 2, kernel_size // 2


# ------------------------------- kernel ----------------------------------------
def _ffn_kernel(x_ref, m_ref, w1_ref, b1_ref, w2_ref, b2_ref, out_ref, *,
                num_taps, pad_l, activation, compute_dtype):
    rows = x_ref.shape[0]
    mask = m_ref[...]                                    # [rows, 1], {0, 1}
    xm = x_ref[...] * mask                               # masked, per-segment padded input

    def conv_taps(src, w_ref, b_ref):
        # src: [rows, C_in] f32.  w_ref: [K, C_in, C_out].  Returns f32 [rows, C_out].
        acc = None
        for k in range(num_taps):                        # static unroll: K is tiny
            shift = (pad_l - k) % rows                   # row r reads src[r + k - pad_l]
            win = src if shift == 0 else pltpu.roll(src, shift=shift, axis=0)
            part = jnp.dot(win.astype(compute_dtype), w_ref[k],
                           preferred_element_type=jnp.float32)
            acc = part if acc is None else acc + part
        return acc + b_ref[...]                          # single f32 bias add

    # conv_1(pad(x * x_mask))
    h = conv_taps(xm, w1_ref, b1_ref)
    # activation
    if activation == "gelu":
        h = h * (1.0 / (1.0 + jnp.exp(-1.702 * h)))      # x * sigmoid(1.702 * x)
    else:
        h = jnp.maximum(h, 0.0)                          # relu
    # TODO(synk): nn.Dropout is identity here (p_dropout=0 / inference); not implemented.
    hm = h * mask                                        # == pad(h * x_mask) on data rows
    # conv_2(pad(h * x_mask))
    y = conv_taps(hm, w2_ref, b2_ref)
    out_ref[...] = (y * mask).astype(out_ref.dtype)      # final "* x_mask"


# ------------------------------- wrapper ----------------------------------------
def ffn_pallas(x, x_mask, conv1_w, conv1_b, conv2_w, conv2_b, *, kernel_size,
               activation=None, causal=False, compute_dtype=jnp.float32,
               segments_per_block=None):
    """x: [B, T, C_in], x_mask: [B, T, 1].  Conv weights in torch Conv1d layout
    ([C_out, C_in, K]), biases [C_out].  Returns [B, T, out_channels] (float32)."""
    batch, t_len, c_in = x.shape
    filt = conv1_w.shape[0]
    c_out = conv2_w.shape[0]
    k = kernel_size
    pad_l, pad_r = _pad_amounts(k, causal)

    # Per-batch "segment": time axis gets pad_l zeros in front and >= pad_r zeros
    # behind, rounded up to a sublane multiple (8); segments are then flattened into
    # one [rows, C] slab.  Every conv window of a real output row stays inside its
    # own segment, so row tiles made of whole segments never need a halo.
    seg = max(_round_up(t_len + pad_l + pad_r, 8), 8)
    pad_back = seg - t_len - pad_l
    xp = jnp.pad(x, ((0, 0), (pad_l, pad_back), (0, 0)))
    mp = jnp.pad(x_mask.astype(x.dtype), ((0, 0), (pad_l, pad_back), (0, 0)))
    rows = batch * seg
    xp2 = xp.reshape(rows, c_in)
    mp2 = mp.reshape(rows, 1)

    # torch Conv1d weight [C_out, C_in, K] -> per-tap matmul weight [K, C_in, C_out].
    w1 = jnp.transpose(conv1_w, (2, 1, 0)).astype(compute_dtype)
    w2 = jnp.transpose(conv2_w, (2, 1, 0)).astype(compute_dtype)
    b1 = conv1_b.reshape(1, filt).astype(jnp.float32)
    b2 = conv2_b.reshape(1, c_out).astype(jnp.float32)

    if segments_per_block is None:
        segments_per_block = batch            # whole batch in one grid step (toy sizes)
    assert batch % segments_per_block == 0
    block_rows = segments_per_block * seg
    grid = (batch // segments_per_block,)     # "parallel": shards across TCs on v7x

    kernel = functools.partial(
        _ffn_kernel, num_taps=k, pad_l=pad_l,
        activation=activation, compute_dtype=compute_dtype)

    out2 = pl.pallas_call(
        kernel,
        out_shape=jax.ShapeDtypeStruct((rows, c_out), jnp.float32),
        grid=grid,
        in_specs=[
            pl.BlockSpec((block_rows, c_in), lambda i: (i, 0)),
            pl.BlockSpec((block_rows, 1), lambda i: (i, 0)),
            pl.BlockSpec((k, c_in, filt), lambda i: (0, 0, 0)),   # resident weights
            pl.BlockSpec((1, filt), lambda i: (0, 0)),
            pl.BlockSpec((k, filt, c_out), lambda i: (0, 0, 0)),
            pl.BlockSpec((1, c_out), lambda i: (0, 0)),
        ],
        out_specs=pl.BlockSpec((block_rows, c_out), lambda i: (i, 0)),
        compiler_params=pltpu.CompilerParams(dimension_semantics=("parallel",)),
    )(xp2, mp2, w1, b1, w2, b2)

    return out2.reshape(batch, seg, c_out)[:, pad_l:pad_l + t_len, :]


# --------------------------- pure-JAX reference ---------------------------------
def ffn_reference(x, x_mask, conv1_w, conv1_b, conv2_w, conv2_b, *, kernel_size,
                  activation=None, causal=False):
    pad_l, pad_r = _pad_amounts(kernel_size, causal)
    x_ncl = jnp.transpose(x, (0, 2, 1))
    m_ncl = jnp.transpose(x_mask, (0, 2, 1))

    def conv(v, w, b):
        y = jax.lax.conv_general_dilated(
            v, w, window_strides=(1,), padding=[(pad_l, pad_r)],
            dimension_numbers=("NCH", "OIH", "NCH"))
        return y + b[None, :, None]

    h = conv(x_ncl * m_ncl, conv1_w, conv1_b)
    if activation == "gelu":
        h = h * jax.nn.sigmoid(1.702 * h)
    else:
        h = jnp.maximum(h, 0.0)
    y = conv(h * m_ncl, conv2_w, conv2_b)
    return jnp.transpose(y * m_ncl, (0, 2, 1))


# ---------------------------------- main -----------------------------------------
if __name__ == "__main__":
    B, T = 2, 16
    C_IN, FILTER, C_OUT = 16, 64, 16

    key = jax.random.PRNGKey(0)
    ks = jax.random.split(key, 8)

    x = jax.random.normal(ks[0], (B, T, C_IN), jnp.float32)
    lens = jnp.array([T, T - 5])
    x_mask = (jnp.arange(T)[None, :] < lens[:, None]).astype(jnp.float32)[..., None]

    configs = [
        dict(kernel_size=5, activation="gelu", causal=False,
             compute_dtype=jnp.float32, tol=1e-4),
        dict(kernel_size=3, activation=None, causal=True,
             compute_dtype=jnp.float32, tol=1e-4),
        # bf16 MXU operands (v6e/v7x recommendation), f32 accumulation -> looser tol.
        dict(kernel_size=5, activation="gelu", causal=False,
             compute_dtype=jnp.bfloat16, tol=3e-2),
    ]

    for idx, cfg in enumerate(configs):
        K = cfg["kernel_size"]
        kk = jax.random.split(ks[1 + idx], 4)
        lim1 = 1.0 / math.sqrt(C_IN * K)       # torch Conv1d default init bound
        lim2 = 1.0 / math.sqrt(FILTER * K)
        w1 = jax.random.uniform(kk[0], (FILTER, C_IN, K), jnp.float32, -lim1, lim1)
        b1 = jax.random.uniform(kk[1], (FILTER,), jnp.float32, -lim1, lim1)
        w2 = jax.random.uniform(kk[2], (C_OUT, FILTER, K), jnp.float32, -lim2, lim2)
        b2 = jax.random.uniform(kk[3], (C_OUT,), jnp.float32, -lim2, lim2)

        out = ffn_pallas(x, x_mask, w1, b1, w2, b2,
                         kernel_size=K, activation=cfg["activation"],
                         causal=cfg["causal"], compute_dtype=cfg["compute_dtype"])
        out = jax.block_until_ready(out)

        ref = ffn_reference(x, x_mask, w1, b1, w2, b2,
                            kernel_size=K, activation=cfg["activation"],
                            causal=cfg["causal"])
        assert out.shape == (B, T, C_OUT)
        tol = cfg["tol"]
        assert jnp.allclose(out, ref, atol=tol, rtol=tol), f"mismatch in config {idx}"

    print("KERNEL_OK")
</pallas_src>

<mosaic_0001>
module attributes {stable_mosaic.version = 11 : i64} {
  func.func @_ffn_kernel(%arg0: i32, %arg1: memref<48x16xf32, #tpu.memory_space<vmem>>, %arg2: memref<48x1xf32, #tpu.memory_space<vmem>>, %arg3: memref<5x16x64xf32, #tpu.memory_space<vmem>>, %arg4: memref<1x64xf32, #tpu.memory_space<vmem>>, %arg5: memref<5x64x16xf32, #tpu.memory_space<vmem>>, %arg6: memref<1x16xf32, #tpu.memory_space<vmem>>, %arg7: memref<48x16xf32, #tpu.memory_space<vmem>>) attributes {dimension_semantics = [#tpu.dimension_semantics<parallel>], iteration_bounds = array<i64: 1>, scalar_prefetch = 0 : i64, scratch_operands = 0 : i64, tpu.core_type = #tpu.core_type<tc>, window_params = [{transform_indices = @transform_0, window_bounds = array<i64: 48, 16>}, {transform_indices = @transform_1, window_bounds = array<i64: 48, 1>}, {pipeline_mode = #tpu.pipeline_mode<synchronous>, transform_indices = @transform_2, window_bounds = array<i64: 5, 16, 64>}, {pipeline_mode = #tpu.pipeline_mode<synchronous>, transform_indices = @transform_3, window_bounds = array<i64: 1, 64>}, {pipeline_mode = #tpu.pipeline_mode<synchronous>, transform_indices = @transform_4, window_bounds = array<i64: 5, 64, 16>}, {pipeline_mode = #tpu.pipeline_mode<synchronous>, transform_indices = @transform_5, window_bounds = array<i64: 1, 16>}, {transform_indices = @transform_6, window_bounds = array<i64: 48, 16>}]} {
    %c0 = arith.constant 0 : index
    %c0_0 = arith.constant 0 : index
    %0 = vector.load %arg2[%c0, %c0_0] : memref<48x1xf32, #tpu.memory_space<vmem>>, vector<48x1xf32>
    %c0_1 = arith.constant 0 : index
    %c0_2 = arith.constant 0 : index
    %1 = vector.load %arg1[%c0_1, %c0_2] : memref<48x16xf32, #tpu.memory_space<vmem>>, vector<48x16xf32>
    %2 = vector.broadcast %0 : vector<48x1xf32> to vector<48x16xf32>
    %3 = arith.mulf %1, %2 : vector<48x16xf32>
    %c2_i32 = arith.constant 2 : i32
    %4 = tpu.dynamic_rotate %3 by %c2_i32 dim 0 : vector<48x16xf32>, i32 -> vector<48x16xf32>
    %c0_3 = arith.constant 0 : index
    %c0_4 = arith.constant 0 : index
    %c0_5 = arith.constant 0 : index
    %5 = vector.load %arg3[%c0_3, %c0_4, %c0_5] : memref<5x16x64xf32, #tpu.memory_space<vmem>>, vector<1x16x64xf32>
    %6 = vector.shape_cast %5 : vector<1x16x64xf32> to vector<16x64xf32>
    %cst = arith.constant dense<0.000000e+00> : vector<48x64xf32>
    %7 = tpu.matmul %4, %6, %cst {dimension_numbers = #tpu.dot_dimension_numbers<[1], [0], [0], [1], [0, 0, 1, 1], [], []>} : vector<48x16xf32>, vector<16x64xf32>, vector<48x64xf32> -> vector<48x64xf32>
    %c1_i32 = arith.constant 1 : i32
    %8 = tpu.dynamic_rotate %3 by %c1_i32 dim 0 : vector<48x16xf32>, i32 -> vector<48x16xf32>
    %c1 = arith.constant 1 : index
    %c0_6 = arith.constant 0 : index
    %c0_7 = arith.constant 0 : index
    %9 = vector.load %arg3[%c1, %c0_6, %c0_7] : memref<5x16x64xf32, #tpu.memory_space<vmem>>, vector<1x16x64xf32>
    %10 = vector.shape_cast %9 : vector<1x16x64xf32> to vector<16x64xf32>
    %cst_8 = arith.constant dense<0.000000e+00> : vector<48x64xf32>
    %11 = tpu.matmul %8, %10, %cst_8 {dimension_numbers = #tpu.dot_dimension_numbers<[1], [0], [0], [1], [0, 0, 1, 1], [], []>} : vector<48x16xf32>, vector<16x64xf32>, vector<48x64xf32> -> vector<48x64xf32>
    %12 = arith.addf %7, %11 : vector<48x64xf32>
    %c2 = arith.constant 2 : index
    %c0_9 = arith.constant 0 : index
    %c0_10 = arith.constant 0 : index
    %13 = vector.load %arg3[%c2, %c0_9, %c0_10] : memref<5x16x64xf32, #tpu.memory_space<vmem>>, vector<1x16x64xf32>
    %14 = vector.shape_cast %13 : vector<1x16x64xf32> to vector<16x64xf32>
    %cst_11 = arith.constant dense<0.000000e+00> : vector<48x64xf32>
    %15 = tpu.matmul %3, %14, %cst_11 {dimension_numbers = #tpu.dot_dimension_numbers<[1], [0], [0], [1], [0, 0, 1, 1], [], []>} : vector<48x16xf32>, vector<16x64xf32>, vector<48x64xf32> -> vector<48x64xf32>
    %16 = arith.addf %12, %15 : vector<48x64xf32>
    %c47_i32 = arith.constant 47 : i32
    %17 = tpu.dynamic_rotate %3 by %c47_i32 dim 0 : vector<48x16xf32>, i32 -> vector<48x16xf32>
    %c3 = arith.constant 3 : index
    %c0_12 = arith.constant 0 : index
    %c0_13 = arith.constant 0 : index
    %18 = vector.load %arg3[%c3, %c0_12, %c0_13] : memref<5x16x64xf32, #tpu.memory_space<vmem>>, vector<1x16x64xf32>
    %19 = vector.shape_cast %18 : vector<1x16x64xf32> to vector<16x64xf32>
    %cst_14 = arith.constant dense<0.000000e+00> : vector<48x64xf32>
    %20 = tpu.matmul %17, %19, %cst_14 {dimension_numbers = #tpu.dot_dimension_numbers<[1], [0], [0], [1], [0, 0, 1, 1], [], []>} : vector<48x16xf32>, vector<16x64xf32>, vector<48x64xf32> -> vector<48x64xf32>
    %21 = arith.addf %16, %20 : vector<48x64xf32>
    %c46_i32 = arith.constant 46 : i32
    %22 = tpu.dynamic_rotate %3 by %c46_i32 dim 0 : vector<48x16xf32>, i32 -> vector<48x16xf32>
    %c4 = arith.constant 4 : index
    %c0_15 = arith.constant 0 : index
    %c0_16 = arith.constant 0 : index
    %23 = vector.load %arg3[%c4, %c0_15, %c0_16] : memref<5x16x64xf32, #tpu.memory_space<vmem>>, vector<1x16x64xf32>
    %24 = vector.shape_cast %23 : vector<1x16x64xf32> to vector<16x64xf32>
    %cst_17 = arith.constant dense<0.000000e+00> : vector<48x64xf32>
    %25 = tpu.matmul %22, %24, %cst_17 {dimension_numbers = #tpu.dot_dimension_numbers<[1], [0], [0], [1], [0, 0, 1, 1], [], []>} : vector<48x16xf32>, vector<16x64xf32>, vector<48x64xf32> -> vector<48x64xf32>
    %26 = arith.addf %21, %25 : vector<48x64xf32>
    %c0_18 = arith.constant 0 : index
    %c0_19 = arith.constant 0 : index
    %27 = vector.load %arg4[%c0_18, %c0_19] : memref<1x64xf32, #tpu.memory_space<vmem>>, vector<1x64xf32>
    %28 = vector.broadcast %27 : vector<1x64xf32> to vector<48x64xf32>
    %29 = arith.addf %26, %28 : vector<48x64xf32>
    %cst_20 = arith.constant -1.702000e+00 : f32
    %30 = vector.broadcast %cst_20 : f32 to vector<48x64xf32>
    %31 = arith.mulf %30, %29 : vector<48x64xf32>
    %32 = math.exp %31 : vector<48x64xf32>
    %cst_21 = arith.constant 1.000000e+00 : f32
    %33 = vector.broadcast %cst_21 : f32 to vector<48x64xf32>
    %34 = arith.addf %33, %32 : vector<48x64xf32>
    %cst_22 = arith.constant 1.000000e+00 : f32
    %35 = vector.broadcast %cst_22 : f32 to vector<48x64xf32>
    %36 = arith.divf %35, %34 : vector<48x64xf32>
    %37 = arith.mulf %29, %36 : vector<48x64xf32>
    %38 = vector.broadcast %0 : vector<48x1xf32> to vector<48x64xf32>
    %39 = arith.mulf %37, %38 : vector<48x64xf32>
    %c2_i32_23 = arith.constant 2 : i32
    %40 = tpu.dynamic_rotate %39 by %c2_i32_23 dim 0 : vector<48x64xf32>, i32 -> vector<48x64xf32>
    %c0_24 = arith.constant 0 : index
    %c0_25 = arith.constant 0 : index
    %c0_26 = arith.constant 0 : index
    %41 = vector.load %arg5[%c0_24, %c0_25, %c0_26] : memref<5x64x16xf32, #tpu.memory_space<vmem>>, vector<1x64x16xf32>
    %42 = vector.shape_cast %41 : vector<1x64x16xf32> to vector<64x16xf32>
    %cst_27 = arith.constant dense<0.000000e+00> : vector<48x16xf32>
    %43 = tpu.matmul %40, %42, %cst_27 {dimension_numbers = #tpu.dot_dimension_numbers<[1], [0], [0], [1], [0, 0, 1, 1], [], []>} : vector<48x64xf32>, vector<64x16xf32>, vector<48x16xf32> -> vector<48x16xf32>
    %c1_i32_28 = arith.constant 1 : i32
    %44 = tpu.dynamic_rotate %39 by %c1_i32_28 dim 0 : vector<48x64xf32>, i32 -> vector<48x64xf32>
    %c1_29 = arith.constant 1 : index
    %c0_30 = arith.constant 0 : index
    %c0_31 = arith.constant 0 : index
    %45 = vector.load %arg5[%c1_29, %c0_30, %c0_31] : memref<5x64x16xf32, #tpu.memory_space<vmem>>, vector<1x64x16xf32>
    %46 = vector.shape_cast %45 : vector<1x64x16xf32> to vector<64x16xf32>
    %cst_32 = arith.constant dense<0.000000e+00> : vector<48x16xf32>
    %47 = tpu.matmul %44, %46, %cst_32 {dimension_numbers = #tpu.dot_dimension_numbers<[1], [0], [0], [1], [0, 0, 1, 1], [], []>} : vector<48x64xf32>, vector<64x16xf32>, vector<48x16xf32> -> vector<48x16xf32>
    %48 = arith.addf %43, %47 : vector<48x16xf32>
    %c2_33 = arith.constant 2 : index
    %c0_34 = arith.constant 0 : index
    %c0_35 = arith.constant 0 : index
    %49 = vector.load %arg5[%c2_33, %c0_34, %c0_35] : memref<5x64x16xf32, #tpu.memory_space<vmem>>, vector<1x64x16xf32>
    %50 = vector.shape_cast %49 : vector<1x64x16xf32> to vector<64x16xf32>
    %cst_36 = arith.constant dense<0.000000e+00> : vector<48x16xf32>
    %51 = tpu.matmul %39, %50, %cst_36 {dimension_numbers = #tpu.dot_dimension_numbers<[1], [0], [0], [1], [0, 0, 1, 1], [], []>} : vector<48x64xf32>, vector<64x16xf32>, vector<48x16xf32> -> vector<48x16xf32>
    %52 = arith.addf %48, %51 : vector<48x16xf32>
    %c47_i32_37 = arith.constant 47 : i32
    %53 = tpu.dynamic_rotate %39 by %c47_i32_37 dim 0 : vector<48x64xf32>, i32 -> vector<48x64xf32>
    %c3_38 = arith.constant 3 : index
    %c0_39 = arith.constant 0 : index
    %c0_40 = arith.constant 0 : index
    %54 = vector.load %arg5[%c3_38, %c0_39, %c0_40] : memref<5x64x16xf32, #tpu.memory_space<vmem>>, vector<1x64x16xf32>
    %55 = vector.shape_cast %54 : vector<1x64x16xf32> to vector<64x16xf32>
    %cst_41 = arith.constant dense<0.000000e+00> : vector<48x16xf32>
    %56 = tpu.matmul %53, %55, %cst_41 {dimension_numbers = #tpu.dot_dimension_numbers<[1], [0], [0], [1], [0, 0, 1, 1], [], []>} : vector<48x64xf32>, vector<64x16xf32>, vector<48x16xf32> -> vector<48x16xf32>
    %57 = arith.addf %52, %56 : vector<48x16xf32>
    %c46_i32_42 = arith.constant 46 : i32
    %58 = tpu.dynamic_rotate %39 by %c46_i32_42 dim 0 : vector<48x64xf32>, i32 -> vector<48x64xf32>
    %c4_43 = arith.constant 4 : index
    %c0_44 = arith.constant 0 : index
    %c0_45 = arith.constant 0 : index
    %59 = vector.load %arg5[%c4_43, %c0_44, %c0_45] : memref<5x64x16xf32, #tpu.memory_space<vmem>>, vector<1x64x16xf32>
    %60 = vector.shape_cast %59 : vector<1x64x16xf32> to vector<64x16xf32>
    %cst_46 = arith.constant dense<0.000000e+00> : vector<48x16xf32>
    %61 = tpu.matmul %58, %60, %cst_46 {dimension_numbers = #tpu.dot_dimension_numbers<[1], [0], [0], [1], [0, 0, 1, 1], [], []>} : vector<48x64xf32>, vector<64x16xf32>, vector<48x16xf32> -> vector<48x16xf32>
    %62 = arith.addf %57, %61 : vector<48x16xf32>
    %c0_47 = arith.constant 0 : index
    %c0_48 = arith.constant 0 : index
    %63 = vector.load %arg6[%c0_47, %c0_48] : memref<1x16xf32, #tpu.memory_space<vmem>>, vector<1x16xf32>
    %64 = vector.broadcast %63 : vector<1x16xf32> to vector<48x16xf32>
    %65 = arith.addf %62, %64 : vector<48x16xf32>
    %66 = vector.broadcast %0 : vector<48x1xf32> to vector<48x16xf32>
    %67 = arith.mulf %65, %66 : vector<48x16xf32>
    %c0_49 = arith.constant 0 : index
    %c0_50 = arith.constant 0 : index
    %68 = vector.load %arg7[%c0_49, %c0_50] : memref<48x16xf32, #tpu.memory_space<vmem>>, vector<48x16xf32>
    tpu.vector_store %arg7[%c0_49, %c0_50], %67 {strides = array<i32>} : memref<48x16xf32, #tpu.memory_space<vmem>>, vector<48x16xf32>,
    return
  }
  func.func @transform_0(%arg0: i32) -> (i32, i32) {
    %c0_i32 = arith.constant 0 : i32
    %c0_i32_0 = arith.constant 0 : i32
    return %arg0, %c0_i32 : i32, i32
  }
  func.func @transform_1(%arg0: i32) -> (i32, i32) {
    %c0_i32 = arith.constant 0 : i32
    %c0_i32_0 = arith.constant 0 : i32
    return %arg0, %c0_i32 : i32, i32
  }
  func.func @transform_2(%arg0: i32) -> (i32, i32, i32) {
    %c0_i32 = arith.constant 0 : i32
    %c0_i32_0 = arith.constant 0 : i32
    %c0_i32_1 = arith.constant 0 : i32
    %c0_i32_2 = arith.constant 0 : i32
    return %c0_i32, %c0_i32_0, %c0_i32_1 : i32, i32, i32
  }
  func.func @transform_3(%arg0: i32) -> (i32, i32) {
    %c0_i32 = arith.constant 0 : i32
    %c0_i32_0 = arith.constant 0 : i32
    %c0_i32_1 = arith.constant 0 : i32
    return %c0_i32, %c0_i32_0 : i32, i32
  }
  func.func @transform_4(%arg0: i32) -> (i32, i32, i32) {
    %c0_i32 = arith.constant 0 : i32
    %c0_i32_0 = arith.constant 0 : i32
    %c0_i32_1 = arith.constant 0 : i32
    %c0_i32_2 = arith.constant 0 : i32
    return %c0_i32, %c0_i32_0, %c0_i32_1 : i32, i32, i32
  }
  func.func @transform_5(%arg0: i32) -> (i32, i32) {
    %c0_i32 = arith.constant 0 : i32
    %c0_i32_0 = arith.constant 0 : i32
    %c0_i32_1 = arith.constant 0 : i32
    return %c0_i32, %c0_i32_0 : i32, i32
  }
  func.func @transform_6(%arg0: i32) -> (i32, i32) {
    %c0_i32 = arith.constant 0 : i32
    %c0_i32_0 = arith.constant 0 : i32
    return %arg0, %c0_i32 : i32, i32
  }
}

</mosaic_0001>

<llo_original>
// kernel: tpu_custom_call.1
$region0: #{tpu_custom_call.1}
  #allocation0 [shape = 'u32[]', space=smem, size = 0x4, offset = 0x4, fixed_abs, tag = 'smem constant byte address 0x4 - core index']
  #allocation1 [shape = 'u32[72,128]{1,0:T(1,128)}', space=vmem, size = 0x9000, scoped, tag = 'internal scratch']
  %s0 = inlined_call_operand.vmem [shape: f32[48,16], index: 0, kind: input, shape index: {}]
  %s1 = inlined_call_operand.vmem [shape: f32[48,1], index: 1, kind: input, shape index: {}]
  %s2 = inlined_call_operand.vmem [shape: f32[5,16,64], index: 2, kind: input, shape index: {}]
  %s3 = inlined_call_operand.vmem [shape: f32[1,64], index: 3, kind: input, shape index: {}]
  %s4 = inlined_call_operand.vmem [shape: f32[5,64,16], index: 4, kind: input, shape index: {}]
  %s5 = inlined_call_operand.vmem [shape: f32[1,16], index: 5, kind: input, shape index: {}]
  %s6 = inlined_call_operand.vmem [shape: f32[48,16], index: 6, kind: output, shape index: {}]
  %s7 = sld [smem:[#allocation0]]
  $region34: #{tpu_custom_call.1} parent=0
    _
  %s9 = ssub.s32 1, %s7
  %s10 = scalar_select 0, %s9, %s7
  // Predicated region
  $region2: #{tpu_custom_call.1} parent=0 // pred_check
    _
  $region3: #{tpu_custom_call.1} parent=0 // pred_check_branch
    %12 = sbr.rel (0) target = $region5
  $region4: #{tpu_custom_call.1} parent=0 // pred_region
    _
  $region5: #{tpu_custom_call.1} parent=0 // pred_fallthru
    _
  // Predicated region
  $region6: #{tpu_custom_call.1} parent=0 // pred_check
    _
  $region7: #{tpu_custom_call.1} parent=0 // pred_check_branch
    %14 = sbr.rel (0) target = $region9
  $region8: #{tpu_custom_call.1} parent=0 // pred_region
    _
  $region9: #{tpu_custom_call.1} parent=0 // pred_fallthru
    _
  // Predicated region
  $region10: #{tpu_custom_call.1} parent=0 // pred_check
    _
  $region11: #{tpu_custom_call.1} parent=0 // pred_check_branch
    %16 = sbr.rel (0) target = $region13
  $region12: #{tpu_custom_call.1} parent=0 // pred_region
    _
  $region13: #{tpu_custom_call.1} parent=0 // pred_fallthru
    _
  // Predicated region
  $region14: #{tpu_custom_call.1} parent=0 // pred_check
    _
  $region15: #{tpu_custom_call.1} parent=0 // pred_check_branch
    %18 = sbr.rel (0) target = $region17
  $region16: #{tpu_custom_call.1} parent=0 // pred_region
    _
  $region17: #{tpu_custom_call.1} parent=0 // pred_fallthru
    _
  // Predicated region
  $region18: #{tpu_custom_call.1} parent=0 // pred_check
    _
  $region19: #{tpu_custom_call.1} parent=0 // pred_check_branch
    %20 = sbr.rel (0) target = $region21
  $region20: #{tpu_custom_call.1} parent=0 // pred_region
    _
  $region21: #{tpu_custom_call.1} parent=0 // pred_fallthru
    _
  // Predicated region
  $region22: #{tpu_custom_call.1} parent=0 // pred_check
    _
  $region23: #{tpu_custom_call.1} parent=0 // pred_check_branch
    %22 = sbr.rel (0) target = $region25
  $region24: #{tpu_custom_call.1} parent=0 // pred_region
    _
  $region25: #{tpu_custom_call.1} parent=0 // pred_fallthru
    _
  %v23 = vld [vmem:[%s1] sm:$0xff]
  %v24 = vld [vmem:[%s1 + $0x8] sm:$0xff]
  %v25 = vld [vmem:[%s1 + $0x10] sm:$0xff]
  %v26 = vld [vmem:[%s1 + $0x18] sm:$0xff]
  %v27 = vld [vmem:[%s1 + $0x20] sm:$0xff]
  %v28 = vld [vmem:[%s1 + $0x28] sm:$0xff]
  %v29 = vld [vmem:[%s0] sm:$0xff]
  %v30 = vld [vmem:[%s0 + $0x8] sm:$0xff]
  %v31 = vld [vmem:[%s0 + $0x10] sm:$0xff]
  %v32 = vld [vmem:[%s0 + $0x18] sm:$0xff]
  %v33 = vld [vmem:[%s0 + $0x20] sm:$0xff]
  %v34 = vld [vmem:[%s0 + $0x28] sm:$0xff]
  %36 = vset.pattern.permute.xlu0 0
  %37 = vperm.xlu0 %36, %v23
  %v38 = vpop.permute.xlu0 %37
  %41 = vset.pattern.permute.xlu0 0
  %42 = vperm.xlu0 %41, %v24
  %v43 = vpop.permute.xlu0 %42
  %46 = vset.pattern.permute.xlu0 0
  %47 = vperm.xlu0 %46, %v25
  %v48 = vpop.permute.xlu0 %47
  %51 = vset.pattern.permute.xlu0 0
  %52 = vperm.xlu0 %51, %v26
  %v53 = vpop.permute.xlu0 %52
  %56 = vset.pattern.permute.xlu0 0
  %57 = vperm.xlu0 %56, %v27
  %v58 = vpop.permute.xlu0 %57
  %61 = vset.pattern.permute.xlu0 0
  %62 = vperm.xlu0 %61, %v28
  %v63 = vpop.permute.xlu0 %62
  %v65 = vmul.f32 %v29, %v38
  %v66 = vmul.f32 %v30, %v43
  %v67 = vmul.f32 %v31, %v48
  %v68 = vmul.f32 %v32, %v53
  %v69 = vmul.f32 %v33, %v58
  %v70 = vmul.f32 %v34, %v63
  %v71 = vrot.slane %v65, 6
  %v72 = vrot.slane %v66, 6
  %v73 = vrot.slane %v67, 6
  %v74 = vrot.slane %v68, 6
  %v75 = vrot.slane %v69, 6
  %v76 = vrot.slane %v70, 6
  %v77 = vlaneseq
  %v78 = vshrl.u32 %v77, 7
  %vm79 = vcmp.lt.s32.totalorder %v78, 2
  %v80 = vsel %vm79, %v75, %v76
  %v81 = vsel %vm79, %v74, %v75
  %v82 = vsel %vm79, %v73, %v74
  %v83 = vsel %vm79, %v72, %v73
  %v84 = vsel %vm79, %v71, %v72
  %v85 = vsel %vm79, %v76, %v71
  %v86 = vld [vmem:[%s2] sm:$0xff]
  %v87 = vld [vmem:[%s2 + $0x8] sm:$0xff]
  %v88 = vrot.slane %v65, 7
  %v89 = vrot.slane %v66, 7
  %v90 = vrot.slane %v67, 7
  %v91 = vrot.slane %v68, 7
  %v92 = vrot.slane %v69, 7
  %v93 = vrot.slane %v70, 7
  %vm94 = vcmp.lt.s32.totalorder %v78, 1
  %v95 = vsel %vm94, %v92, %v93
  %v96 = vsel %vm94, %v91, %v92
  %v97 = vsel %vm94, %v90, %v91
  %v98 = vsel %vm94, %v89, %v90
  %v99 = vsel %vm94, %v88, %v89
  %v100 = vsel %vm94, %v93, %v88
  %s101 = scalar_lea.vmem %s2, 16
  %v102 = vld [vmem:[%s101] sm:$0xff]
  %v103 = vld [vmem:[%s101 + $0x8] sm:$0xff]
  %vm104 = vcmask 130048
  %v106 = vsel %vm104, %v100, 0
  %v109 = vsel %vm104, %v99, 0
  %v112 = vsel %vm104, %v98, 0
  %v115 = vsel %vm104, %v97, 0
  %v118 = vsel %vm104, %v96, 0
  %v121 = vsel %vm104, %v95, 0
  %123 = vmatpush.msra.mxu0 0.0
  %124 = vmatpush.msra.mxu0 0.0
  %125 = vmatpush.msra.mxu0 0.0
  %126 = vmatpush.msra.mxu0 0.0
  %127 = vmatpush.msra.mxu0 0.0
  %128 = vmatpush.msra.mxu0 0.0
  %129 = vmatpush.msra.mxu0 0.0
  %130 = vmatpush.msra.mxu0 0.0
  %131 = vmatpush.msra.mxu0 0.0
  %132 = vmatpush.msra.mxu0 0.0
  %133 = vmatpush.msra.mxu0 0.0
  %134 = vmatpush.msra.mxu0 0.0
  %135 = vmatpush.msra.mxu0 0.0
  %136 = vmatpush.msra.mxu0 0.0
  %137 = vmatpush.msra.mxu0 %v103
  %138 = vmatpush.msra.mxu0 %v102
  %139 = vmatmul.f32.gmra.mxu0 %v106
  %v140 = vpop.f32.mrf.mxu0
  %v141 = vadd.f32 0.0, %v140
  %142 = vmatmul.f32.gmra.mxu0 %v109
  %v143 = vpop.f32.mrf.mxu0
  %v144 = vadd.f32 0.0, %v143
  %145 = vmatmul.f32.gmra.mxu0 %v112
  %v146 = vpop.f32.mrf.mxu0
  %v147 = vadd.f32 0.0, %v146
  %148 = vmatmul.f32.gmra.mxu0 %v115
  %v149 = vpop.f32.mrf.mxu0
  %v150 = vadd.f32 0.0, %v149
  %151 = vmatmul.f32.gmra.mxu0 %v118
  %v152 = vpop.f32.mrf.mxu0
  %v153 = vadd.f32 0.0, %v152
  %154 = vmatmul.f32.gmra.mxu0 %v121
  %v155 = vpop.f32.mrf.mxu0
  %v156 = vadd.f32 0.0, %v155
  %157 = vdwg.mxu0
  %v159 = vsel %vm104, %v85, 0
  %v162 = vsel %vm104, %v84, 0
  %v165 = vsel %vm104, %v83, 0
  %v168 = vsel %vm104, %v82, 0
  %v171 = vsel %vm104, %v81, 0
  %v174 = vsel %vm104, %v80, 0
  %176 = vmatpush.msra.mxu0 0.0
  %177 = vmatpush.msra.mxu0 0.0
  %178 = vmatpush.msra.mxu0 0.0
  %179 = vmatpush.msra.mxu0 0.0
  %180 = vmatpush.msra.mxu0 0.0
  %181 = vmatpush.msra.mxu0 0.0
  %182 = vmatpush.msra.mxu0 0.0
  %183 = vmatpush.msra.mxu0 0.0
  %184 = vmatpush.msra.mxu0 0.0
  %185 = vmatpush.msra.mxu0 0.0
  %186 = vmatpush.msra.mxu0 0.0
  %187 = vmatpush.msra.mxu0 0.0
  %188 = vmatpush.msra.mxu0 0.0
  %189 = vmatpush.msra.mxu0 0.0
  %190 = vmatpush.msra.mxu0 %v87
  %191 = vmatpush.msra.mxu0 %v86
  %192 = vmatmul.f32.gmra.mxu0 %v159
  %v193 = vpop.f32.mrf.mxu0
  %v194 = vadd.f32 %v141, %v193
  %195 = vmatmul.f32.gmra.mxu0 %v162
  %v196 = vpop.f32.mrf.mxu0
  %v197 = vadd.f32 %v144, %v196
  %198 = vmatmul.f32.gmra.mxu0 %v165
  %v199 = vpop.f32.mrf.mxu0
  %v200 = vadd.f32 %v147, %v199
  %201 = vmatmul.f32.gmra.mxu0 %v168
  %v202 = vpop.f32.mrf.mxu0
  %v203 = vadd.f32 %v150, %v202
  %204 = vmatmul.f32.gmra.mxu0 %v171
  %v205 = vpop.f32.mrf.mxu0
  %v206 = vadd.f32 %v153, %v205
  %207 = vmatmul.f32.gmra.mxu0 %v174
  %v208 = vpop.f32.mrf.mxu0
  %v209 = vadd.f32 %v156, %v208
  %210 = vdwg.mxu0
  %s211 = scalar_lea.vmem %s2, 32
  %v212 = vld [vmem:[%s211] sm:$0xff]
  %v213 = vld [vmem:[%s211 + $0x8] sm:$0xff]
  %v215 = vsel %vm104, %v65, 0
  %v218 = vsel %vm104, %v66, 0
  %v221 = vsel %vm104, %v67, 0
  %v224 = vsel %vm104, %v68, 0
  %v227 = vsel %vm104, %v69, 0
  %v230 = vsel %vm104, %v70, 0
  %232 = vmatpush.msra.mxu0 0.0
  %233 = vmatpush.msra.mxu0 0.0
  %234 = vmatpush.msra.mxu0 0.0
  %235 = vmatpush.msra.mxu0 0.0
  %236 = vmatpush.msra.mxu0 0.0
  %237 = vmatpush.msra.mxu0 0.0
  %238 = vmatpush.msra.mxu0 0.0
  %239 = vmatpush.msra.mxu0 0.0
  %240 = vmatpush.msra.mxu0 0.0
  %241 = vmatpush.msra.mxu0 0.0
  %242 = vmatpush.msra.mxu0 0.0
  %243 = vmatpush.msra.mxu0 0.0
  %244 = vmatpush.msra.mxu0 0.0
  %245 = vmatpush.msra.mxu0 0.0
  %246 = vmatpush.msra.mxu0 %v213
  %247 = vmatpush.msra.mxu0 %v212
  %248 = vmatmul.f32.gmra.mxu0 %v215
  %v249 = vpop.f32.mrf.mxu0
  %v250 = vadd.f32 0.0, %v249
  %251 = vmatmul.f32.gmra.mxu0 %v218
  %v252 = vpop.f32.mrf.mxu0
  %v253 = vadd.f32 0.0, %v252
  %254 = vmatmul.f32.gmra.mxu0 %v221
  %v255 = vpop.f32.mrf.mxu0
  %v256 = vadd.f32 0.0, %v255
  %257 = vmatmul.f32.gmra.mxu0 %v224
  %v258 = vpop.f32.mrf.mxu0
  %v259 = vadd.f32 0.0, %v258
  %260 = vmatmul.f32.gmra.mxu0 %v227
  %v261 = vpop.f32.mrf.mxu0
  %v262 = vadd.f32 0.0, %v261
  %263 = vmatmul.f32.gmra.mxu0 %v230
  %v264 = vpop.f32.mrf.mxu0
  %v265 = vadd.f32 0.0, %v264
  %266 = vdwg.mxu0
  %v267 = vadd.f32 %v194, %v250
  %v268 = vadd.f32 %v197, %v253
  %v269 = vadd.f32 %v200, %v256
  %v270 = vadd.f32 %v203, %v259
  %v271 = vadd.f32 %v206, %v262
  %v272 = vadd.f32 %v209, %v265
  %v273 = vrot.slane %v65, 1
  %v274 = vrot.slane %v66, 1
  %v275 = vrot.slane %v67, 1
  %v276 = vrot.slane %v68, 1
  %v277 = vrot.slane %v69, 1
  %v278 = vrot.slane %v70, 1
  %vm279 = vcmp.lt.s32.totalorder %v78, 7
  %v280 = vsel %vm279, %v277, %v278
  %v281 = vsel %vm279, %v276, %v277
  %v282 = vsel %vm279, %v275, %v276
  %v283 = vsel %vm279, %v274, %v275
  %v284 = vsel %vm279, %v273, %v274
  %v285 = vsel %vm279, %v278, %v273
  %s286 = scalar_lea.vmem %s2, 48
  %v287 = vld [vmem:[%s286] sm:$0xff]
  %v288 = vld [vmem:[%s286 + $0x8] sm:$0xff]
  %v290 = vsel %vm104, %v284, 0
  %v293 = vsel %vm104, %v283, 0
  %v296 = vsel %vm104, %v282, 0
  %v299 = vsel %vm104, %v281, 0
  %v302 = vsel %vm104, %v280, 0
  %v305 = vsel %vm104, %v285, 0
  %307 = vmatpush.msra.mxu0 0.0
  %308 = vmatpush.msra.mxu0 0.0
  %309 = vmatpush.msra.mxu0 0.0
  %310 = vmatpush.msra.mxu0 0.0
  %311 = vmatpush.msra.mxu0 0.0
  %312 = vmatpush.msra.mxu0 0.0
  %313 = vmatpush.msra.mxu0 0.0
  %314 = vmatpush.msra.mxu0 0.0
  %315 = vmatpush.msra.mxu0 0.0
  %316 = vmatpush.msra.mxu0 0.0
  %317 = vmatpush.msra.mxu0 0.0
  %318 = vmatpush.msra.mxu0 0.0
  %319 = vmatpush.msra.mxu0 0.0
  %320 = vmatpush.msra.mxu0 0.0
  %321 = vmatpush.msra.mxu0 %v288
  %322 = vmatpush.msra.mxu0 %v287
  %323 = vmatmul.f32.gmra.mxu0 %v290
  %v324 = vpop.f32.mrf.mxu0
  %v325 = vadd.f32 0.0, %v324
  %326 = vmatmul.f32.gmra.mxu0 %v293
  %v327 = vpop.f32.mrf.mxu0
  %v328 = vadd.f32 0.0, %v327
  %329 = vmatmul.f32.gmra.mxu0 %v296
  %v330 = vpop.f32.mrf.mxu0
  %v331 = vadd.f32 0.0, %v330
  %332 = vmatmul.f32.gmra.mxu0 %v299
  %v333 = vpop.f32.mrf.mxu0
  %v334 = vadd.f32 0.0, %v333
  %335 = vmatmul.f32.gmra.mxu0 %v302
  %v336 = vpop.f32.mrf.mxu0
  %v337 = vadd.f32 0.0, %v336
  %338 = vmatmul.f32.gmra.mxu0 %v305
  %v339 = vpop.f32.mrf.mxu0
  %v340 = vadd.f32 0.0, %v339
  %341 = vdwg.mxu0
  %v342 = vadd.f32 %v267, %v325
  %v343 = vadd.f32 %v268, %v328
  %v344 = vadd.f32 %v269, %v331
  %v345 = vadd.f32 %v270, %v334
  %v346 = vadd.f32 %v271, %v337
  %v347 = vadd.f32 %v272, %v340
  %v348 = vrot.slane %v65, 2
  %v349 = vrot.slane %v66, 2
  %v350 = vrot.slane %v67, 2
  %v351 = vrot.slane %v68, 2
  %v352 = vrot.slane %v69, 2
  %v353 = vrot.slane %v70, 2
  %vm354 = vcmp.lt.s32.totalorder %v78, 6
  %v355 = vsel %vm354, %v352, %v353
  %v356 = vsel %vm354, %v351, %v352
  %v357 = vsel %vm354, %v350, %v351
  %v358 = vsel %vm354, %v349, %v350
  %v359 = vsel %vm354, %v348, %v349
  %v360 = vsel %vm354, %v353, %v348
  %s361 = scalar_lea.vmem %s2, 64
  %v362 = vld [vmem:[%s361] sm:$0xff]
  %v363 = vld [vmem:[%s361 + $0x8] sm:$0xff]
  %v365 = vsel %vm104, %v359, 0
  %v368 = vsel %vm104, %v358, 0
  %v371 = vsel %vm104, %v357, 0
  %v374 = vsel %vm104, %v356, 0
  %v377 = vsel %vm104, %v355, 0
  %v380 = vsel %vm104, %v360, 0
  %382 = vmatpush.msra.mxu0 0.0
  %383 = vmatpush.msra.mxu0 0.0
  %384 = vmatpush.msra.mxu0 0.0
  %385 = vmatpush.msra.mxu0 0.0
  %386 = vmatpush.msra.mxu0 0.0
  %387 = vmatpush.msra.mxu0 0.0
  %388 = vmatpush.msra.mxu0 0.0
  %389 = vmatpush.msra.mxu0 0.0
  %390 = vmatpush.msra.mxu0 0.0
  %391 = vmatpush.msra.mxu0 0.0
  %392 = vmatpush.msra.mxu0 0.0
  %393 = vmatpush.msra.mxu0 0.0
  %394 = vmatpush.msra.mxu0 0.0
  %395 = vmatpush.msra.mxu0 0.0
  %396 = vmatpush.msra.mxu0 %v363
  %397 = vmatpush.msra.mxu0 %v362
  %398 = vmatmul.f32.gmra.mxu0 %v365
  %v399 = vpop.f32.mrf.mxu0
  %v400 = vadd.f32 0.0, %v399
  %401 = vmatmul.f32.gmra.mxu0 %v368
  %v402 = vpop.f32.mrf.mxu0
  %v403 = vadd.f32 0.0, %v402
  %404 = vmatmul.f32.gmra.mxu0 %v371
  %v405 = vpop.f32.mrf.mxu0
  %v406 = vadd.f32 0.0, %v405
  %407 = vmatmul.f32.gmra.mxu0 %v374
  %v408 = vpop.f32.mrf.mxu0
  %v409 = vadd.f32 0.0, %v408
  %410 = vmatmul.f32.gmra.mxu0 %v377
  %v411 = vpop.f32.mrf.mxu0
  %v412 = vadd.f32 0.0, %v411
  %413 = vmatmul.f32.gmra.mxu0 %v380
  %v414 = vpop.f32.mrf.mxu0
  %v415 = vadd.f32 0.0, %v414
  %416 = vdwg.mxu0
  %v417 = vadd.f32 %v342, %v400
  %v418 = vadd.f32 %v343, %v403
  %v419 = vadd.f32 %v344, %v406
  %v420 = vadd.f32 %v345, %v409
  %v421 = vadd.f32 %v346, %v412
  %v422 = vadd.f32 %v347, %v415
  %v423 = vld [vmem:[%s3] sm:$0x1]
  %v425 = vperm.slane %v423, 0
  %v427 = vadd.f32 %v417, %v425
  %v428 = vadd.f32 %v418, %v425
  %v429 = vadd.f32 %v419, %v425
  %v430 = vadd.f32 %v420, %v425
  %v431 = vadd.f32 %v421, %v425
  %v432 = vadd.f32 %v422, %v425
  %v433 = vmul.f32 %v427, -1.702
  %v434 = vmul.f32 %v428, -1.702
  %v435 = vmul.f32 %v429, -1.702
  %v436 = vmul.f32 %v430, -1.702
  %v437 = vmul.f32 %v431, -1.702
  %v438 = vmul.f32 %v432, -1.702
  %v439 = vmul.f32 %v433, 1.442695
  %v440 = vpow.pop %v439
  %v441 = vmul.f32 %v434, 1.442695
  %v442 = vpow.pop %v441
  %v443 = vmul.f32 %v435, 1.442695
  %v444 = vpow.pop %v443
  %v445 = vmul.f32 %v436, 1.442695
  %v446 = vpow.pop %v445
  %v447 = vmul.f32 %v437, 1.442695
  %v448 = vpow.pop %v447
  %v449 = vmul.f32 %v438, 1.442695
  %v450 = vpow.pop %v449
  %v451 = vadd.f32 %v440, 1.0
  %v452 = vadd.f32 %v442, 1.0
  %v453 = vadd.f32 %v444, 1.0
  %v454 = vadd.f32 %v446, 1.0
  %v455 = vadd.f32 %v448, 1.0
  %v456 = vadd.f32 %v450, 1.0
  %v457 = vrcp.pop %v451
  %v458 = vmul.f32 %v451, %v457
  %v459 = vsub.f32 1.0, %v458
  %v460 = vmul.f32 %v457, %v459
  %v461 = vadd.f32 %v457, %v460
  %vm462 = vweird.f32 %v451
  %vm463 = vweird.f32 %v457
  %vm464 = vmor %vm462, %vm463
  %v465 = vsel %vm464, %v457, %v461
  %v466 = vand.u32 2147483647, %v451
  %vm467 = vcmp.eq.f32.partialorder %v466, 8.507059e+37
  %v468 = vand.u32 %v451, 2147483648
  %v469 = vor.u32 1.1754944e-38, %v468
  %v470 = vsel %vm467, %v469, %v465
  %v471 = vmul.f32 1.0, %v470
  %v472 = vrcp.pop %v452
  %v473 = vmul.f32 %v452, %v472
  %v474 = vsub.f32 1.0, %v473
  %v475 = vmul.f32 %v472, %v474
  %v476 = vadd.f32 %v472, %v475
  %vm477 = vweird.f32 %v452
  %vm478 = vweird.f32 %v472
  %vm479 = vmor %vm477, %vm478
  %v480 = vsel %vm479, %v472, %v476
  %v481 = vand.u32 2147483647, %v452
  %vm482 = vcmp.eq.f32.partialorder %v481, 8.507059e+37
  %v483 = vand.u32 %v452, 2147483648
  %v484 = vor.u32 1.1754944e-38, %v483
  %v485 = vsel %vm482, %v484, %v480
  %v486 = vmul.f32 1.0, %v485
  %v487 = vrcp.pop %v453
  %v488 = vmul.f32 %v453, %v487
  %v489 = vsub.f32 1.0, %v488
  %v490 = vmul.f32 %v487, %v489
  %v491 = vadd.f32 %v487, %v490
  %vm492 = vweird.f32 %v453
  %vm493 = vweird.f32 %v487
  %vm494 = vmor %vm492, %vm493
  %v495 = vsel %vm494, %v487, %v491
  %v496 = vand.u32 2147483647, %v453
  %vm497 = vcmp.eq.f32.partialorder %v496, 8.507059e+37
  %v498 = vand.u32 %v453, 2147483648
  %v499 = vor.u32 1.1754944e-38, %v498
  %v500 = vsel %vm497, %v499, %v495
  %v501 = vmul.f32 1.0, %v500
  %v502 = vrcp.pop %v454
  %v503 = vmul.f32 %v454, %v502
  %v504 = vsub.f32 1.0, %v503
  %v505 = vmul.f32 %v502, %v504
  %v506 = vadd.f32 %v502, %v505
  %vm507 = vweird.f32 %v454
  %vm508 = vweird.f32 %v502
  %vm509 = vmor %vm507, %vm508
  %v510 = vsel %vm509, %v502, %v506
  %v511 = vand.u32 2147483647, %v454
  %vm512 = vcmp.eq.f32.partialorder %v511, 8.507059e+37
  %v513 = vand.u32 %v454, 2147483648
  %v514 = vor.u32 1.1754944e-38, %v513
  %v515 = vsel %vm512, %v514, %v510
  %v516 = vmul.f32 1.0, %v515
  %v517 = vrcp.pop %v455
  %v518 = vmul.f32 %v455, %v517
  %v519 = vsub.f32 1.0, %v518
  %v520 = vmul.f32 %v517, %v519
  %v521 = vadd.f32 %v517, %v520
  %vm522 = vweird.f32 %v455
  %vm523 = vweird.f32 %v517
  %vm524 = vmor %vm522, %vm523
  %v525 = vsel %vm524, %v517, %v521
  %v526 = vand.u32 2147483647, %v455
  %vm527 = vcmp.eq.f32.partialorder %v526, 8.507059e+37
  %v528 = vand.u32 %v455, 2147483648
  %v529 = vor.u32 1.1754944e-38, %v528
  %v530 = vsel %vm527, %v529, %v525
  %v531 = vmul.f32 1.0, %v530
  %v532 = vrcp.pop %v456
  %v533 = vmul.f32 %v456, %v532
  %v534 = vsub.f32 1.0, %v533
  %v535 = vmul.f32 %v532, %v534
  %v536 = vadd.f32 %v532, %v535
  %vm537 = vweird.f32 %v456
  %vm538 = vweird.f32 %v532
  %vm539 = vmor %vm537, %vm538
  %v540 = vsel %vm539, %v532, %v536
  %v541 = vand.u32 2147483647, %v456
  %vm542 = vcmp.eq.f32.partialorder %v541, 8.507059e+37
  %v543 = vand.u32 %v456, 2147483648
  %v544 = vor.u32 1.1754944e-38, %v543
  %v545 = vsel %vm542, %v544, %v540
  %v546 = vmul.f32 1.0, %v545
  %v547 = vmul.f32 %v427, %v471
  %v548 = vmul.f32 %v428, %v486
  %v549 = vmul.f32 %v429, %v501
  %v550 = vmul.f32 %v430, %v516
  %v551 = vmul.f32 %v431, %v531
  %v552 = vmul.f32 %v432, %v546
  %v553 = vmul.f32 %v547, %v38
  %v554 = vmul.f32 %v548, %v43
  %v555 = vmul.f32 %v549, %v48
  %v556 = vmul.f32 %v550, %v53
  %v557 = vmul.f32 %v551, %v58
  %v558 = vmul.f32 %v552, %v63
  %v559 = vrot.slane %v553, 6
  %v560 = vrot.slane %v554, 6
  %v561 = vrot.slane %v555, 6
  %v562 = vrot.slane %v556, 6
  %v563 = vrot.slane %v557, 6
  %v564 = vrot.slane %v558, 6
  %v565 = vsel %vm79, %v563, %v564
  %v566 = vsel %vm79, %v562, %v563
  %v567 = vsel %vm79, %v561, %v562
  %v568 = vsel %vm79, %v560, %v561
  %v569 = vsel %vm79, %v559, %v560
  %v570 = vsel %vm79, %v564, %v559
  %v571 = vld [vmem:[%s4] sm:$0xff]
  %v572 = vld [vmem:[%s4 + $0x8] sm:$0xff]
  %v573 = vld [vmem:[%s4 + $0x10] sm:$0xff]
  %v574 = vld [vmem:[%s4 + $0x18] sm:$0xff]
  %v575 = vld [vmem:[%s4 + $0x20] sm:$0xff]
  %v576 = vld [vmem:[%s4 + $0x28] sm:$0xff]
  %v577 = vld [vmem:[%s4 + $0x30] sm:$0xff]
  %v578 = vld [vmem:[%s4 + $0x38] sm:$0xff]
  %v579 = vrot.slane %v553, 7
  %v580 = vrot.slane %v554, 7
  %v581 = vrot.slane %v555, 7
  %v582 = vrot.slane %v556, 7
  %v583 = vrot.slane %v557, 7
  %v584 = vrot.slane %v558, 7
  %v585 = vsel %vm94, %v583, %v584
  %v586 = vsel %vm94, %v582, %v583
  %v587 = vsel %vm94, %v581, %v582
  %v588 = vsel %vm94, %v580, %v581
  %v589 = vsel %vm94, %v579, %v580
  %v590 = vsel %vm94, %v584, %v579
  %s591 = scalar_lea.vmem %s4, 64
  %v592 = vld [vmem:[%s591] sm:$0xff]
  %v593 = vld [vmem:[%s591 + $0x8] sm:$0xff]
  %v594 = vld [vmem:[%s591 + $0x10] sm:$0xff]
  %v595 = vld [vmem:[%s591 + $0x18] sm:$0xff]
  %v596 = vld [vmem:[%s591 + $0x20] sm:$0xff]
  %v597 = vld [vmem:[%s591 + $0x28] sm:$0xff]
  %v598 = vld [vmem:[%s591 + $0x30] sm:$0xff]
  %v599 = vld [vmem:[%s591 + $0x38] sm:$0xff]
  %vm600 = vcmask 523264
  %v602 = vsel %vm600, %v590, 0
  %v605 = vsel %vm600, %v589, 0
  %v608 = vsel %vm600, %v588, 0
  %v611 = vsel %vm600, %v587, 0
  %v614 = vsel %vm600, %v586, 0
  %v617 = vsel %vm600, %v585, 0
  %619 = vmatpush.msra.mxu0 0.0
  %620 = vmatpush.msra.mxu0 0.0
  %621 = vmatpush.msra.mxu0 0.0
  %622 = vmatpush.msra.mxu0 0.0
  %623 = vmatpush.msra.mxu0 0.0
  %624 = vmatpush.msra.mxu0 0.0
  %625 = vmatpush.msra.mxu0 0.0
  %626 = vmatpush.msra.mxu0 0.0
  %627 = vmatpush.msra.mxu0 %v599
  %628 = vmatpush.msra.mxu0 %v598
  %629 = vmatpush.msra.mxu0 %v597
  %630 = vmatpush.msra.mxu0 %v596
  %631 = vmatpush.msra.mxu0 %v595
  %632 = vmatpush.msra.mxu0 %v594
  %633 = vmatpush.msra.mxu0 %v593
  %634 = vmatpush.msra.mxu0 %v592
  %635 = vmatmul.f32.gmra.mxu0 %v602
  %v636 = vpop.f32.mrf.mxu0
  %v637 = vadd.f32 0.0, %v636
  %638 = vmatmul.f32.gmra.mxu0 %v605
  %v639 = vpop.f32.mrf.mxu0
  %v640 = vadd.f32 0.0, %v639
  %641 = vmatmul.f32.gmra.mxu0 %v608
  %v642 = vpop.f32.mrf.mxu0
  %v643 = vadd.f32 0.0, %v642
  %644 = vmatmul.f32.gmra.mxu0 %v611
  %v645 = vpop.f32.mrf.mxu0
  %v646 = vadd.f32 0.0, %v645
  %647 = vmatmul.f32.gmra.mxu0 %v614
  %v648 = vpop.f32.mrf.mxu0
  %v649 = vadd.f32 0.0, %v648
  %650 = vmatmul.f32.gmra.mxu0 %v617
  %v651 = vpop.f32.mrf.mxu0
  %v652 = vadd.f32 0.0, %v651
  %653 = vdwg.mxu0
  %v655 = vsel %vm600, %v570, 0
  %v658 = vsel %vm600, %v569, 0
  %v661 = vsel %vm600, %v568, 0
  %v664 = vsel %vm600, %v567, 0
  %v667 = vsel %vm600, %v566, 0
  %v670 = vsel %vm600, %v565, 0
  %672 = vmatpush.msra.mxu0 0.0
  %673 = vmatpush.msra.mxu0 0.0
  %674 = vmatpush.msra.mxu0 0.0
  %675 = vmatpush.msra.mxu0 0.0
  %676 = vmatpush.msra.mxu0 0.0
  %677 = vmatpush.msra.mxu0 0.0
  %678 = vmatpush.msra.mxu0 0.0
  %679 = vmatpush.msra.mxu0 0.0
  %680 = vmatpush.msra.mxu0 %v578
  %681 = vmatpush.msra.mxu0 %v577
  %682 = vmatpush.msra.mxu0 %v576
  %683 = vmatpush.msra.mxu0 %v575
  %684 = vmatpush.msra.mxu0 %v574
  %685 = vmatpush.msra.mxu0 %v573
  %686 = vmatpush.msra.mxu0 %v572
  %687 = vmatpush.msra.mxu0 %v571
  %688 = vmatmul.f32.gmra.mxu0 %v655
  %v689 = vpop.f32.mrf.mxu0
  %v690 = vadd.f32 %v637, %v689
  %691 = vmatmul.f32.gmra.mxu0 %v658
  %v692 = vpop.f32.mrf.mxu0
  %v693 = vadd.f32 %v640, %v692
  %694 = vmatmul.f32.gmra.mxu0 %v661
  %v695 = vpop.f32.mrf.mxu0
  %v696 = vadd.f32 %v643, %v695
  %697 = vmatmul.f32.gmra.mxu0 %v664
  %v698 = vpop.f32.mrf.mxu0
  %v699 = vadd.f32 %v646, %v698
  %700 = vmatmul.f32.gmra.mxu0 %v667
  %v701 = vpop.f32.mrf.mxu0
  %v702 = vadd.f32 %v649, %v701
  %703 = vmatmul.f32.gmra.mxu0 %v670
  %v704 = vpop.f32.mrf.mxu0
  %v705 = vadd.f32 %v652, %v704
  %706 = vdwg.mxu0
  %s707 = scalar_lea.vmem %s4, 128
  %v708 = vld [vmem:[%s707] sm:$0xff]
  %v709 = vld [vmem:[%s707 + $0x8] sm:$0xff]
  %v710 = vld [vmem:[%s707 + $0x10] sm:$0xff]
  %v711 = vld [vmem:[%s707 + $0x18] sm:$0xff]
  %v712 = vld [vmem:[%s707 + $0x20] sm:$0xff]
  %v713 = vld [vmem:[%s707 + $0x28] sm:$0xff]
  %v714 = vld [vmem:[%s707 + $0x30] sm:$0xff]
  %v715 = vld [vmem:[%s707 + $0x38] sm:$0xff]
  %v717 = vsel %vm600, %v553, 0
  %v720 = vsel %vm600, %v554, 0
  %v723 = vsel %vm600, %v555, 0
  %v726 = vsel %vm600, %v556, 0
  %v729 = vsel %vm600, %v557, 0
  %v732 = vsel %vm600, %v558, 0
  %734 = vmatpush.msra.mxu0 0.0
  %735 = vmatpush.msra.mxu0 0.0
  %736 = vmatpush.msra.mxu0 0.0
  %737 = vmatpush.msra.mxu0 0.0
  %738 = vmatpush.msra.mxu0 0.0
  %739 = vmatpush.msra.mxu0 0.0
  %740 = vmatpush.msra.mxu0 0.0
  %741 = vmatpush.msra.mxu0 0.0
  %742 = vmatpush.msra.mxu0 %v715
  %743 = vmatpush.msra.mxu0 %v714
  %744 = vmatpush.msra.mxu0 %v713
  %745 = vmatpush.msra.mxu0 %v712
  %746 = vmatpush.msra.mxu0 %v711
  %747 = vmatpush.msra.mxu0 %v710
  %748 = vmatpush.msra.mxu0 %v709
  %749 = vmatpush.msra.mxu0 %v708
  %750 = vmatmul.f32.gmra.mxu0 %v717
  %v751 = vpop.f32.mrf.mxu0
  %v752 = vadd.f32 0.0, %v751
  %753 = vmatmul.f32.gmra.mxu0 %v720
  %v754 = vpop.f32.mrf.mxu0
  %v755 = vadd.f32 0.0, %v754
  %756 = vmatmul.f32.gmra.mxu0 %v723
  %v757 = vpop.f32.mrf.mxu0
  %v758 = vadd.f32 0.0, %v757
  %759 = vmatmul.f32.gmra.mxu0 %v726
  %v760 = vpop.f32.mrf.mxu0
  %v761 = vadd.f32 0.0, %v760
  %762 = vmatmul.f32.gmra.mxu0 %v729
  %v763 = vpop.f32.mrf.mxu0
  %v764 = vadd.f32 0.0, %v763
  %765 = vmatmul.f32.gmra.mxu0 %v732
  %v766 = vpop.f32.mrf.mxu0
  %v767 = vadd.f32 0.0, %v766
  %768 = vdwg.mxu0
  %v769 = vadd.f32 %v690, %v752
  %v770 = vadd.f32 %v693, %v755
  %v771 = vadd.f32 %v696, %v758
  %v772 = vadd.f32 %v699, %v761
  %v773 = vadd.f32 %v702, %v764
  %v774 = vadd.f32 %v705, %v767
  %v775 = vrot.slane %v553, 1
  %v776 = vrot.slane %v554, 1
  %v777 = vrot.slane %v555, 1
  %v778 = vrot.slane %v556, 1
  %v779 = vrot.slane %v557, 1
  %v780 = vrot.slane %v558, 1
  %v781 = vsel %vm279, %v779, %v780
  %v782 = vsel %vm279, %v778, %v779
  %v783 = vsel %vm279, %v777, %v778
  %v784 = vsel %vm279, %v776, %v777
  %v785 = vsel %vm279, %v775, %v776
  %v786 = vsel %vm279, %v780, %v775
  %s787 = scalar_lea.vmem %s4, 192
  %v788 = vld [vmem:[%s787] sm:$0xff]
  %v789 = vld [vmem:[%s787 + $0x8] sm:$0xff]
  %v790 = vld [vmem:[%s787 + $0x10] sm:$0xff]
  %v791 = vld [vmem:[%s787 + $0x18] sm:$0xff]
  %v792 = vld [vmem:[%s787 + $0x20] sm:$0xff]
  %v793 = vld [vmem:[%s787 + $0x28] sm:$0xff]
  %v794 = vld [vmem:[%s787 + $0x30] sm:$0xff]
  %v795 = vld [vmem:[%s787 + $0x38] sm:$0xff]
  %v797 = vsel %vm600, %v785, 0
  %v800 = vsel %vm600, %v784, 0
  %v803 = vsel %vm600, %v783, 0
  %v806 = vsel %vm600, %v782, 0
  %v809 = vsel %vm600, %v781, 0
  %v812 = vsel %vm600, %v786, 0
  %814 = vmatpush.msra.mxu0 0.0
  %815 = vmatpush.msra.mxu0 0.0
  %816 = vmatpush.msra.mxu0 0.0
  %817 = vmatpush.msra.mxu0 0.0
  %818 = vmatpush.msra.mxu0 0.0
  %819 = vmatpush.msra.mxu0 0.0
  %820 = vmatpush.msra.mxu0 0.0
  %821 = vmatpush.msra.mxu0 0.0
  %822 = vmatpush.msra.mxu0 %v795
  %823 = vmatpush.msra.mxu0 %v794
  %824 = vmatpush.msra.mxu0 %v793
  %825 = vmatpush.msra.mxu0 %v792
  %826 = vmatpush.msra.mxu0 %v791
  %827 = vmatpush.msra.mxu0 %v790
  %828 = vmatpush.msra.mxu0 %v789
  %829 = vmatpush.msra.mxu0 %v788
  %830 = vmatmul.f32.gmra.mxu0 %v797
  %v831 = vpop.f32.mrf.mxu0
  %v832 = vadd.f32 0.0, %v831
  %833 = vmatmul.f32.gmra.mxu0 %v800
  %v834 = vpop.f32.mrf.mxu0
  %v835 = vadd.f32 0.0, %v834
  %836 = vmatmul.f32.gmra.mxu0 %v803
  %v837 = vpop.f32.mrf.mxu0
  %v838 = vadd.f32 0.0, %v837
  %839 = vmatmul.f32.gmra.mxu0 %v806
  %v840 = vpop.f32.mrf.mxu0
  %v841 = vadd.f32 0.0, %v840
  %842 = vmatmul.f32.gmra.mxu0 %v809
  %v843 = vpop.f32.mrf.mxu0
  %v844 = vadd.f32 0.0, %v843
  %845 = vmatmul.f32.gmra.mxu0 %v812
  %v846 = vpop.f32.mrf.mxu0
  %v847 = vadd.f32 0.0, %v846
  %848 = vdwg.mxu0
  %v849 = vadd.f32 %v769, %v832
  %v850 = vadd.f32 %v770, %v835
  %v851 = vadd.f32 %v771, %v838
  %v852 = vadd.f32 %v772, %v841
  %v853 = vadd.f32 %v773, %v844
  %v854 = vadd.f32 %v774, %v847
  %v855 = vrot.slane %v553, 2
  %v856 = vrot.slane %v554, 2
  %v857 = vrot.slane %v555, 2
  %v858 = vrot.slane %v556, 2
  %v859 = vrot.slane %v557, 2
  %v860 = vrot.slane %v558, 2
  %v861 = vsel %vm354, %v859, %v860
  %v862 = vsel %vm354, %v858, %v859
  %v863 = vsel %vm354, %v857, %v858
  %v864 = vsel %vm354, %v856, %v857
  %v865 = vsel %vm354, %v855, %v856
  %v866 = vsel %vm354, %v860, %v855
  %s867 = scalar_lea.vmem %s4, 256
  %v868 = vld [vmem:[%s867] sm:$0xff]
  %v869 = vld [vmem:[%s867 + $0x8] sm:$0xff]
  %v870 = vld [vmem:[%s867 + $0x10] sm:$0xff]
  %v871 = vld [vmem:[%s867 + $0x18] sm:$0xff]
  %v872 = vld [vmem:[%s867 + $0x20] sm:$0xff]
  %v873 = vld [vmem:[%s867 + $0x28] sm:$0xff]
  %v874 = vld [vmem:[%s867 + $0x30] sm:$0xff]
  %v875 = vld [vmem:[%s867 + $0x38] sm:$0xff]
  %v877 = vsel %vm600, %v865, 0
  %v880 = vsel %vm600, %v864, 0
  %v883 = vsel %vm600, %v863, 0
  %v886 = vsel %vm600, %v862, 0
  %v889 = vsel %vm600, %v861, 0
  %v892 = vsel %vm600, %v866, 0
  %894 = vmatpush.msra.mxu0 0.0
  %895 = vmatpush.msra.mxu0 0.0
  %896 = vmatpush.msra.mxu0 0.0
  %897 = vmatpush.msra.mxu0 0.0
  %898 = vmatpush.msra.mxu0 0.0
  %899 = vmatpush.msra.mxu0 0.0
  %900 = vmatpush.msra.mxu0 0.0
  %901 = vmatpush.msra.mxu0 0.0
  %902 = vmatpush.msra.mxu0 %v875
  %903 = vmatpush.msra.mxu0 %v874
  %904 = vmatpush.msra.mxu0 %v873
  %905 = vmatpush.msra.mxu0 %v872
  %906 = vmatpush.msra.mxu0 %v871
  %907 = vmatpush.msra.mxu0 %v870
  %908 = vmatpush.msra.mxu0 %v869
  %909 = vmatpush.msra.mxu0 %v868
  %910 = vmatmul.f32.gmra.mxu0 %v877
  %v911 = vpop.f32.mrf.mxu0
  %v912 = vadd.f32 0.0, %v911
  %913 = vmatmul.f32.gmra.mxu0 %v880
  %v914 = vpop.f32.mrf.mxu0
  %v915 = vadd.f32 0.0, %v914
  %916 = vmatmul.f32.gmra.mxu0 %v883
  %v917 = vpop.f32.mrf.mxu0
  %v918 = vadd.f32 0.0, %v917
  %919 = vmatmul.f32.gmra.mxu0 %v886
  %v920 = vpop.f32.mrf.mxu0
  %v921 = vadd.f32 0.0, %v920
  %922 = vmatmul.f32.gmra.mxu0 %v889
  %v923 = vpop.f32.mrf.mxu0
  %v924 = vadd.f32 0.0, %v923
  %925 = vmatmul.f32.gmra.mxu0 %v892
  %v926 = vpop.f32.mrf.mxu0
  %v927 = vadd.f32 0.0, %v926
  %928 = vdwg.mxu0
  %v929 = vadd.f32 %v849, %v912
  %v930 = vadd.f32 %v850, %v915
  %v931 = vadd.f32 %v851, %v918
  %v932 = vadd.f32 %v852, %v921
  %v933 = vadd.f32 %v853, %v924
  %v934 = vadd.f32 %v854, %v927
  %v935 = vld [vmem:[%s5] sm:$0x1]
  %v937 = vperm.slane %v935, 0
  %v939 = vadd.f32 %v929, %v937
  %v940 = vadd.f32 %v930, %v937
  %v941 = vadd.f32 %v931, %v937
  %v942 = vadd.f32 %v932, %v937
  %v943 = vadd.f32 %v933, %v937
  %v944 = vadd.f32 %v934, %v937
  %v945 = vmul.f32 %v939, %v38
  %v946 = vmul.f32 %v940, %v43
  %v947 = vmul.f32 %v941, %v48
  %v948 = vmul.f32 %v942, %v53
  %v949 = vmul.f32 %v943, %v58
  %v950 = vmul.f32 %v944, %v63
  %951 = vst.msk [vmem:[%s6] sm:$0xff] %vm104, %v945
  %952 = vst.msk [vmem:[%s6 + $0x8] sm:$0xff] %vm104, %v946
  %953 = vst.msk [vmem:[%s6 + $0x10] sm:$0xff] %vm104, %v947
  %954 = vst.msk [vmem:[%s6 + $0x18] sm:$0xff] %vm104, %v948
  %955 = vst.msk [vmem:[%s6 + $0x20] sm:$0xff] %vm104, %v949
  %956 = vst.msk [vmem:[%s6 + $0x28] sm:$0xff] %vm104, %v950
  // Predicated region
  $region26: #{tpu_custom_call.1} parent=0 // pred_check
    _
  $region27: #{tpu_custom_call.1} parent=0 // pred_check_branch
    %958 = sbr.rel (0) target = $region29
  $region28: #{tpu_custom_call.1} parent=0 // pred_region
    _
  $region29: #{tpu_custom_call.1} parent=0 // pred_fallthru
    _
  // Predicated region
  $region30: #{tpu_custom_call.1} parent=0 // pred_check
    _
  $region31: #{tpu_custom_call.1} parent=0 // pred_check_branch
    %960 = sbr.rel (0) target = $region33
  $region32: #{tpu_custom_call.1} parent=0 // pred_region
    _
  $region33: #{tpu_custom_call.1} parent=0 // pred_fallthru
    _

</llo_original>
